<compile_context>
chip_gen: v7x
topology: tpu7x:2x2x1
jax: 0.10.0
libtpu: 0.0.40
codegen_flags: <defaults>
</compile_context>

<pallas_src>
import jax
import jax.numpy as jnp
from jax.experimental import pallas as pl
from jax.experimental.pallas import tpu as pltpu


def _alias_noop_kernel(x_ref, o_ref):
    # Output buffer *is* the input buffer (input_output_aliases={0: 0}); the
    # bytes are already in place.  touch() installs a fake read/write
    # dependency so the aliased output is treated as produced by this op.
    del x_ref
    pltpu.touch(o_ref)


def _dma_copy_kernel(x_ref, o_ref, sem):
    # Whole-array HBM->HBM copy on the DMA engine: no VMEM transit, no grid.
    cp = pltpu.make_async_copy(x_ref, o_ref, sem)
    cp.start()
    cp.wait()


def feature_gen(x: jax.Array) -> jax.Array:
    """Equivalent of FeatureGen.forward: x.reshape(x.shape[0], -1)."""
    B = x.shape[0]
    F = 1
    for d in x.shape[1:]:
        F *= d

    # Glue: row-major flatten (exact match to torch .reshape on a contiguous
    # tensor).  For a default-layout array this is metadata-only in XLA.
    x2d = jnp.reshape(x, (B, F))
    itemsize = jnp.dtype(x.dtype).itemsize
    n_bytes = B * F * itemsize

    out_shape = jax.ShapeDtypeStruct((B, F), x.dtype)

    # ---- Primary: zero-traffic aliased no-op --------------------------------
    try:
        return pl.pallas_call(
            _alias_noop_kernel,
            out_shape=out_shape,
            in_specs=[pl.BlockSpec(memory_space=pl.ANY)],
            out_specs=pl.BlockSpec(memory_space=pl.ANY),
            input_output_aliases={0: 0},
            compiler_params=pltpu.CompilerParams(has_side_effects=True),
            cost_estimate=pl.CostEstimate(
                flops=0, transcendentals=0, bytes_accessed=0
            ),
        )(x2d)
    except Exception:
        # TODO(synk): drop this fallback once pltpu.touch on pl.ANY refs is
        # guaranteed by the minimum supported jax/jaxlib.
        pass

    # ---- Fallback: single whole-array HBM->HBM DMA copy ----------------------
    return pl.pallas_call(
        _dma_copy_kernel,
        out_shape=out_shape,
        in_specs=[pl.BlockSpec(memory_space=pl.ANY)],
        out_specs=pl.BlockSpec(memory_space=pl.ANY),
        scratch_shapes=[pltpu.SemaphoreType.DMA],
        compiler_params=pltpu.CompilerParams(has_side_effects=True),
        cost_estimate=pl.CostEstimate(
            flops=0, transcendentals=0, bytes_accessed=2 * n_bytes
        ),
    )(x2d)


if __name__ == "__main__":
    key = jax.random.PRNGKey(0)
    # Small NCHW-like input consistent with the module's usage.
    B, C, H, W = 2, 4, 16, 16
    x = jax.random.normal(key, (B, C, H, W), dtype=jnp.float32)

    # Compute the reference BEFORE the (potentially aliasing) kernel call.
    ref = jax.block_until_ready(jnp.reshape(x, (B, -1)))

    y = feature_gen(x)
    y = jax.block_until_ready(y)

    assert y.shape == (B, C * H * W), y.shape
    assert y.dtype == x.dtype
    assert bool(jnp.array_equal(y, ref))

    print("KERNEL_OK")
</pallas_src>

<mosaic_0001>
module attributes {stable_mosaic.version = 11 : i64} {
  func.func @_alias_noop_kernel(%arg0: memref<2x1024xf32, #tpu.memory_space<any>>, %arg1: memref<2x1024xf32, #tpu.memory_space<any>>) attributes {dimension_semantics = [], scalar_prefetch = 0 : i64, scratch_operands = 0 : i64, tpu.core_type = #tpu.core_type<tc>} {
    return
  }
}

module attributes {stable_mosaic.version = 11 : i64} {
  func.func @_dma_copy_kernel(%arg0: memref<2x1024xf32, #tpu.memory_space<any>>, %arg1: memref<2x1024xf32, #tpu.memory_space<any>>, %arg2: memref<!tpu.dma_semaphore, #tpu.memory_space<semaphore_mem>>) attributes {dimension_semantics = [], scalar_prefetch = 0 : i64, scratch_operands = 1 : i64, tpu.core_type = #tpu.core_type<tc>} {
    tpu.enqueue_dma source(%arg0 : memref<2x1024xf32, #tpu.memory_space<any>>) target(%arg1 : memref<2x1024xf32, #tpu.memory_space<any>>) target_semaphore(%arg2 : memref<!tpu.dma_semaphore, #tpu.memory_space<semaphore_mem>>)
    tpu.wait_dma2 semaphore(%arg2 : memref<!tpu.dma_semaphore, #tpu.memory_space<semaphore_mem>>) src(%arg0 : memref<2x1024xf32, #tpu.memory_space<any>>) dst(%arg1 : memref<2x1024xf32, #tpu.memory_space<any>>)
    return
  }
}

</mosaic_0001>

<llo_original>
// kernel: tpu_custom_call.1
$region0: #{tpu_custom_call.1}
  #allocation0 [shape = 'u32[]', space=smem, size = 0x4, offset = 0x4, fixed_abs, tag = 'smem constant byte address 0x4 - core index']
  #allocation1 [shape = 'u32[144,128]{1,0:T(1,128)}', space=vmem, size = 0x12000, scoped, tag = 'internal scratch']
  %s0 = inlined_call_operand.hbm [shape: f32[2,1024], index: 0, kind: input, shape index: {}, may-alias: {0,1}]
  %s1 = inlined_call_operand.hbm [shape: f32[2,1024], index: 1, kind: output, shape index: {}, may-alias: {0,1}]
  %s2 = sld [smem:[#allocation0]]
  $region2: #{tpu_custom_call.1} parent=0
    _
  %s4 = ssub.s32 1, %s2
  %s5 = scalar_select 0, %s4, %s2

// kernel: tpu_custom_call.1
$region0: #{tpu_custom_call.1}
  #allocation0 [shape = 'u32[]', space=smem, size = 0x4, offset = 0x4, fixed_abs, tag = 'smem constant byte address 0x4 - core index']
  #allocation1 [shape = 'u32[144,128]{1,0:T(1,128)}', space=vmem, size = 0x12000, scoped, tag = 'internal scratch']
  #allocation2 [shape = 's32[1]{0}', space=sflag, size = 0x4, scoped, tag = 'scratch operand']
  #allocation3 [shape = 's32[]', space=sflag, size = 0x4, offset = 0, fixed_abs, tag = 'sflag constant byte address 0x0 - dummy sync flag']
  #allocation4 [shape = 'u32[0]{0}', space=smem, size = 0, offset = 0, fixed_abs, tag = 'smem constant byte address 0x0 - null']
  %s0 = inlined_call_operand.hbm [shape: f32[2,1024], index: 0, kind: input, shape index: {}]
  %s1 = inlined_call_operand.hbm [shape: f32[2,1024], index: 1, kind: output, shape index: {}]
  %s2 = sld [smem:[#allocation0]]
  $region2: #{tpu_custom_call.1} parent=0
    _
  %s4 = ssub.s32 1, %s2
  %s5 = scalar_select 0, %s4, %s2
  %s7 = sshll.u32 1, 14
  %s8 = sxor.u32 4294967295, %s7
  %s11 = sshll.u32 3, 24
  %s12 = sxor.u32 4294967295, %s11
  %s13 = sand.u32 0, %s12
  %s15 = sor.u32 %s13, 0
  %18 = dma.general %s0, 256, %s1, [#allocation2], [#allocation3], [#allocation4], %s15, 0
  %s19 = smul.u32 2, 1
  %s20 = smul.u32 %s19, 8
  %s21 = sshll.u32 %s20, 4
  %22 = dma.done [#allocation2], %s21
  %23 = vsyncmov [#allocation2]
  %s24 = vpop.sfrf %23
  %p25 = scmp.eq.s32.totalorder %s24, 0
  %p26 = pneg %p25
  %28 = shalt.err (%p26)

</llo_original>
